<compile_context>
chip_gen: v7x
topology: tpu7x:2x2x1
jax: 0.10.0
libtpu: 0.0.40
codegen_flags: <defaults>
</compile_context>

<pallas_src>
import functools

import jax
import jax.numpy as jnp
from jax.experimental import pallas as pl
from jax.experimental.pallas import tpu as pltpu


def _round_up(x, m):
    return ((x + m - 1) // m) * m


def _tile_channels_kernel(x_ref, o_ref, *, n_channels, feat):
    # x_ref: (tb, feat)   o_ref: (tb, n_channels * feat)
    # Read the input block once, then n_channels full-width lane stores.
    x = x_ref[...]
    for r in range(n_channels):
        o_ref[:, r * feat:(r + 1) * feat] = x


def tile_channels(x, n_channels=3, dim=1):
    """Pallas equivalent of TileChannels(dim=1, n_channels).forward(x) for NCHW x."""
    assert dim == 1, "kernel implements channel-dim tiling for NCHW layout"
    # TODO(synk): tiling along dims other than the channel dim of NCHW is not implemented.
    B, C, H, W = x.shape
    feat = C * H * W                      # lane-dense payload per batch row
    itemsize = jnp.dtype(x.dtype).itemsize

    # Layout-aware sizes (what VMEM actually holds after (sublane, lane) padding).
    sublane = max(8, 32 // itemsize)      # 8 for f32, 16 for bf16, 32 for int8
    feat_pad = _round_up(feat, 128)
    out_feat_pad = _round_up(n_channels * feat, 128)
    per_row_bytes = (feat_pad + out_feat_pad) * itemsize

    # Batch tile: target ~8 MiB of double-buffered, padded in+out per grid step,
    # keep it sublane-aligned, and keep >= 2 grid steps whenever B allows it
    # (pipelining + 2-TensorCore sharding on v7x).  Works within v5e's 16 MiB
    # default scoped VMEM as well.
    if B <= sublane:
        tb = B
    else:
        budget = 8 * 1024 * 1024          # double-buffered target
        tb_cap = max(sublane, (budget // (2 * per_row_bytes)) // sublane * sublane)
        tb_half = _round_up(pl.cdiv(B, 2), sublane)   # ensures grid >= 2 steps
        tb = max(sublane, min(tb_cap, tb_half))

    grid = (pl.cdiv(B, tb),)
    double_buffered_bytes = 2 * tb * per_row_bytes
    vmem_limit = min(64 * 1024 * 1024,
                     max(2 * double_buffered_bytes, 8 * 1024 * 1024))

    # Lane-dense 2D view: sublane = batch, lane = C*H*W (contiguous, free reshape).
    x_flat = x.reshape(B, feat)

    kernel = functools.partial(
        _tile_channels_kernel, n_channels=n_channels, feat=feat
    )

    out_flat = pl.pallas_call(
        kernel,
        out_shape=jax.ShapeDtypeStruct((B, n_channels * feat), x.dtype),
        grid=grid,
        in_specs=[pl.BlockSpec((tb, feat), lambda i: (i, 0))],
        out_specs=pl.BlockSpec((tb, n_channels * feat), lambda i: (i, 0)),
        compiler_params=pltpu.CompilerParams(
            dimension_semantics=("parallel",),
            vmem_limit_bytes=vmem_limit,
        ),
        cost_estimate=pl.CostEstimate(
            flops=0,
            transcendentals=0,
            bytes_accessed=(1 + n_channels) * B * feat * itemsize,
        ),
    )(x_flat)

    # (B, n*C*H*W) -> (B, n*C, H, W): contiguous reshape; out channel r*C + c
    # holds in channel c (replica-major), exactly matching torch.tile.
    return out_flat.reshape(B, n_channels * C, H, W)


if __name__ == "__main__":
    key = jax.random.PRNGKey(0)

    # Small shapes consistent with ROInet usage (grayscale ROI images, NCHW),
    # a multi-channel case (C > 1), and a non-divisible batch that exercises
    # the cdiv grid with a masked partial last block.
    cases = [((2, 1, 16, 16), 3), ((2, 4, 16, 16), 3), ((9, 1, 16, 16), 3)]

    for (B, C, H, W), n_channels in cases:
        key, sub = jax.random.split(key)
        x = jax.random.normal(sub, (B, C, H, W), dtype=jnp.float32)

        out = tile_channels(x, n_channels=n_channels, dim=1)
        out = jax.block_until_ready(out)

        # Reference: exact semantics of torch.tile(x, (1, n_channels, 1, 1)).
        ref = jnp.tile(x, (1, n_channels, 1, 1))

        assert out.shape == (B, C * n_channels, H, W), out.shape
        assert out.dtype == x.dtype
        assert jnp.array_equal(out, ref), "mismatch vs jnp.tile reference"

    print("KERNEL_OK")
</pallas_src>

<mosaic_0001>
module attributes {stable_mosaic.version = 11 : i64} {
  func.func @_tile_channels_kernel(%arg0: i32, %arg1: memref<2x256xf32, #tpu.memory_space<vmem>>, %arg2: memref<2x768xf32, #tpu.memory_space<vmem>>) attributes {dimension_semantics = [#tpu.dimension_semantics<parallel>], iteration_bounds = array<i64: 1>, scalar_prefetch = 0 : i64, scratch_operands = 0 : i64, tpu.core_type = #tpu.core_type<tc>, window_params = [{transform_indices = @transform_0, window_bounds = array<i64: 2, 256>}, {transform_indices = @transform_1, window_bounds = array<i64: 2, 768>}]} {
    %c0 = arith.constant 0 : index
    %c0_0 = arith.constant 0 : index
    %0 = vector.load %arg1[%c0, %c0_0] : memref<2x256xf32, #tpu.memory_space<vmem>>, vector<2x256xf32>
    %c0_1 = arith.constant 0 : index
    %c0_2 = arith.constant 0 : index
    %1 = vector.load %arg2[%c0_1, %c0_2] : memref<2x768xf32, #tpu.memory_space<vmem>>, vector<2x256xf32>
    tpu.vector_store %arg2[%c0_1, %c0_2], %0 {strides = array<i32>} : memref<2x768xf32, #tpu.memory_space<vmem>>, vector<2x256xf32>,
    %c0_3 = arith.constant 0 : index
    %c256 = arith.constant 256 : index
    %2 = vector.load %arg2[%c0_3, %c256] : memref<2x768xf32, #tpu.memory_space<vmem>>, vector<2x256xf32>
    tpu.vector_store %arg2[%c0_3, %c256], %0 {strides = array<i32>} : memref<2x768xf32, #tpu.memory_space<vmem>>, vector<2x256xf32>,
    %c0_4 = arith.constant 0 : index
    %c512 = arith.constant 512 : index
    %3 = vector.load %arg2[%c0_4, %c512] : memref<2x768xf32, #tpu.memory_space<vmem>>, vector<2x256xf32>
    tpu.vector_store %arg2[%c0_4, %c512], %0 {strides = array<i32>} : memref<2x768xf32, #tpu.memory_space<vmem>>, vector<2x256xf32>,
    return
  }
  func.func @transform_0(%arg0: i32) -> (i32, i32) {
    %c0_i32 = arith.constant 0 : i32
    %c0_i32_0 = arith.constant 0 : i32
    return %arg0, %c0_i32 : i32, i32
  }
  func.func @transform_1(%arg0: i32) -> (i32, i32) {
    %c0_i32 = arith.constant 0 : i32
    %c0_i32_0 = arith.constant 0 : i32
    return %arg0, %c0_i32 : i32, i32
  }
}

</mosaic_0001>

<llo_original>
// kernel: tpu_custom_call.1
$region0: #{tpu_custom_call.1}
  #allocation0 [shape = 'u32[]', space=smem, size = 0x4, offset = 0x4, fixed_abs, tag = 'smem constant byte address 0x4 - core index']
  #allocation1 [shape = 'u32[144,128]{1,0:T(1,128)}', space=vmem, size = 0x12000, scoped, tag = 'internal scratch']
  %s0 = inlined_call_operand.hbm [shape: f32[2,256], index: 0, kind: input, shape index: {}]
  %s1 = inlined_call_operand.hbm [shape: f32[2,768], index: 1, kind: output, shape index: {}]
  %s2 = sld [smem:[#allocation0]]
  $region18: #{tpu_custom_call.1} parent=0
    _
  %s4 = ssub.s32 1, %s2
  %s5 = scalar_select 0, %s4, %s2
  $region1: #{tpu_custom_call.1} parent=0
    #allocation2 [shape = 'u8[2048]{0}', space=vmem, size = 0x800, scoped, tag = 'input window, operand 0, single buffered']
    #allocation3 [shape = 's32[1]{0}', space=sflag, size = 0x4, scoped, tag = 'scoped memory for tpu_custom_call.1']
    #allocation4 [shape = 's32[1]{0}', space=sflag, size = 0x4, scoped, tag = 'scoped memory for tpu_custom_call.1']
    #allocation5 [shape = 'u8[6144]{0}', space=vmem, size = 0x1800, scoped, tag = 'output window, operand 0, single buffered']
    %6 = vsyncpa [#allocation3], 0
    %7 = vsyncpa [#allocation4], 0
    // Predicated region
    $region2: #{tpu_custom_call.1} parent=1 // pred_check
      _
    $region3: #{tpu_custom_call.1} parent=1 // pred_check_branch
      %9 = sbr.rel (0) target = $region5
    $region4: #{tpu_custom_call.1} parent=1 // pred_region
      %s11 = ssub.s32 64, 64
      %12 = vsyncadd [#allocation3], %s11
      %s14 = sshll.u32 [#allocation2], 4
      %s15 = int_to_ptr.vmem [resolvable:$true] %s14
      %17 = dma.hbm_to_vmem [thread:$0]  %s0, 64, %s15, [#allocation3]
    $region5: #{tpu_custom_call.1} parent=1 // pred_fallthru
      _
    // Predicated region
    $region6: #{tpu_custom_call.1} parent=1 // pred_check
      _
    $region7: #{tpu_custom_call.1} parent=1 // pred_check_branch
      %19 = sbr.rel (0) target = $region9
    $region8: #{tpu_custom_call.1} parent=1 // pred_region
      %20 = dma.done [#allocation3], 64
    $region9: #{tpu_custom_call.1} parent=1 // pred_fallthru
      _
    %v21 = vld [vmem:[#allocation2] sm:$0xf]
    %22 = vst [vmem:[#allocation5] sm:$0xf] %v21
    %23 = vst [vmem:[#allocation5 + $0x4] sm:$0xf] %v21
    %24 = vst [vmem:[#allocation5 + $0x8] sm:$0xf] %v21
    // Predicated region
    $region10: #{tpu_custom_call.1} parent=1 // pred_check
      _
    $region11: #{tpu_custom_call.1} parent=1 // pred_check_branch
      %26 = sbr.rel (0) target = $region13
    $region12: #{tpu_custom_call.1} parent=1 // pred_region
      %s28 = ssub.s32 192, 192
      %29 = vsyncadd [#allocation4], %s28
      %s31 = sshll.u32 [#allocation5], 4
      %s32 = int_to_ptr.vmem [resolvable:$true] %s31
      %34 = dma.vmem_to_hbm [thread:$0]  %s32, 192, %s1, [#allocation4]
    $region13: #{tpu_custom_call.1} parent=1 // pred_fallthru
      _
    // Predicated region
    $region14: #{tpu_custom_call.1} parent=1 // pred_check
      _
    $region15: #{tpu_custom_call.1} parent=1 // pred_check_branch
      %36 = sbr.rel (0) target = $region17
    $region16: #{tpu_custom_call.1} parent=1 // pred_region
      %37 = dma.done [#allocation4], 192
    $region17: #{tpu_custom_call.1} parent=1 // pred_fallthru
      _
    %38 = vsyncpa [#allocation3], 1
    %39 = vsyncpa [#allocation4], 1

</llo_original>
